<compile_context>
chip_gen: v7x
topology: tpu7x:2x2x1
jax: 0.10.0
libtpu: 0.0.40
codegen_flags: <defaults>
</compile_context>

<pallas_src>
import functools

import jax
import jax.numpy as jnp
from jax.experimental import pallas as pl
from jax.experimental.pallas import tpu as pltpu


# --------------------------------------------------------------------------
# Generation-aware budgets
# --------------------------------------------------------------------------
def _tpu_budgets():
    """Return (target_block_bytes, vmem_cap_bytes, min_grid_steps)."""
    vmem_phys = None
    try:
        info = pltpu.get_tpu_info()
        vmem_phys = int(getattr(info, "vmem_capacity_bytes"))
    except Exception:
        vmem_phys = None
    if vmem_phys is None or vmem_phys <= (80 << 20):
        # v7x-class (64 MiB VMEM / TC, 2 TCs) or unknown: conservative cap,
        # and make sure the grid has enough steps to feed both TensorCores.
        return (4 << 20), (48 << 20), 8
    # v5e / v6e: 128 MiB physical VMEM, single TensorCore.
    return (8 << 20), (96 << 20), 1


def _sublane_multiple(dtype):
    # Sub-32-bit dtypes pack along sublanes: f32 -> 8, bf16 -> 16, int8 -> 32.
    return 8 * max(1, 4 // jnp.dtype(dtype).itemsize)


def _pick_tile(dim, other_elems, itemsize, multiple, target_bytes):
    """Largest tile along `dim` (multiple of `multiple`) within target_bytes."""
    per_unit = max(1, other_elems * itemsize)
    tile = target_bytes // per_unit
    tile = (tile // multiple) * multiple
    if tile < multiple:
        tile = multiple
    if tile >= dim:
        return dim
    return tile


def _shrink_for_steps(dim, tile, multiple, batch, min_steps):
    """Shrink `tile` so batch * cdiv(dim, tile) >= min_steps (megacore feed)."""
    if min_steps <= 1:
        return tile

    def steps(t):
        return batch * (-(-dim // t))

    while tile > multiple and steps(tile) < min_steps:
        new_tile = max(multiple, ((tile // 2) // multiple) * multiple)
        if new_tile == tile:
            break
        tile = new_tile
    return tile


def _vmem_limit_bytes(block_in_bytes, block_f32_bytes, cap_bytes):
    # 2x double-buffered input + 2x double-buffered output blocks, the f32
    # working copy of the block, plus headroom for Mosaic internal scratch.
    need = 4 * block_in_bytes + 2 * block_f32_bytes + (4 << 20)
    if need > cap_bytes:
        # TODO(synk): add a two-pass (stats pallas_call, then normalize
        # pallas_call) path that splits the reduction axis for huge H*W / L.
        raise ValueError(
            f"AdaIN block needs ~{need >> 20} MiB VMEM but the per-generation "
            f"cap is {cap_bytes >> 20} MiB; reduction axis is too large for a "
            "single-pass block."
        )
    return int(max(need, 16 << 20))


def _inv_nm1(n):
    # torch.std uses Bessel's correction (ddof=1); n == 1 yields NaN just like
    # the reference (documented behavior, matches torch).
    return 1.0 / (n - 1) if n > 1 else float("nan")


# --------------------------------------------------------------------------
# Kernels
# --------------------------------------------------------------------------
def _adain_cn_kernel(x_ref, smean_ref, sstd_ref, o_ref, *, eps, inv_nm1):
    """4D path block: (1, Ct, N); reduce over the lane axis N."""
    x = x_ref[...].astype(jnp.float32)                              # (1, Ct, N)
    mu = jnp.mean(x, axis=-1, keepdims=True)                        # (1, Ct, 1)
    var = jnp.sum(jnp.square(x - mu), axis=-1, keepdims=True) * jnp.float32(inv_nm1)
    std = jnp.sqrt(var) + jnp.float32(eps)
    inv_std = pl.reciprocal(std, approx=False)                      # per-channel
    scale = sstd_ref[...].astype(jnp.float32) * inv_std             # (1, Ct, 1)
    shift = smean_ref[...].astype(jnp.float32) - mu * scale         # (1, Ct, 1)
    # Fused write: no materialized diff; re-reads the resident x block.
    o_ref[...] = (x * scale + shift).astype(o_ref.dtype)


def _adain_lc_kernel(x_ref, smean_ref, sstd_ref, o_ref, *, eps, inv_nm1):
    """3D path block: (1, L, Ct); reduce over the sublane axis L (C lane-dense)."""
    x = x_ref[...].astype(jnp.float32)                              # (1, L, Ct)
    mu = jnp.mean(x, axis=-2, keepdims=True)                        # (1, 1, Ct)
    var = jnp.sum(jnp.square(x - mu), axis=-2, keepdims=True) * jnp.float32(inv_nm1)
    std = jnp.sqrt(var) + jnp.float32(eps)
    inv_std = pl.reciprocal(std, approx=False)
    scale = sstd_ref[...].astype(jnp.float32) * inv_std             # (1, 1, Ct)
    shift = smean_ref[...].astype(jnp.float32) - mu * scale         # (1, 1, Ct)
    o_ref[...] = (x * scale + shift).astype(o_ref.dtype)


# --------------------------------------------------------------------------
# pallas_call wrappers
# --------------------------------------------------------------------------
def _adain_4d(x_bcn, smean_bc1, sstd_bc1, eps, c_tile=None):
    """x_bcn: (B, C, N); smean/sstd: (B, C, 1). Stats over N per (b, c)."""
    B, C, N = x_bcn.shape
    itemsize = jnp.dtype(x_bcn.dtype).itemsize
    target, cap, min_steps = _tpu_budgets()
    mult = _sublane_multiple(x_bcn.dtype)
    if c_tile is None:
        c_tile = _pick_tile(C, N, itemsize, mult, target)
        c_tile = _shrink_for_steps(C, c_tile, mult, B, min_steps)
    c_tile = min(int(c_tile), C)

    block_in = c_tile * N * itemsize
    block_f32 = c_tile * N * 4
    s_item = jnp.dtype(smean_bc1.dtype).itemsize
    cost = pl.CostEstimate(
        flops=int(6 * B * C * N),
        transcendentals=int(2 * B * C),
        bytes_accessed=int(2 * B * C * N * itemsize + 4 * B * C * s_item),
    )

    # TODO(synk): fuse/load the (B, C) style stats once per batch instead of
    # per channel tile (tiny DMA descriptors; noise at these block sizes).
    kernel = functools.partial(_adain_cn_kernel, eps=float(eps), inv_nm1=_inv_nm1(N))
    return pl.pallas_call(
        kernel,
        out_shape=jax.ShapeDtypeStruct((B, C, N), x_bcn.dtype),
        grid_spec=pltpu.PrefetchScalarGridSpec(
            num_scalar_prefetch=0,
            grid=(B, pl.cdiv(C, c_tile)),
            in_specs=[
                pl.BlockSpec((1, c_tile, N), lambda b, c: (b, c, 0)),
                pl.BlockSpec((1, c_tile, 1), lambda b, c: (b, c, 0)),
                pl.BlockSpec((1, c_tile, 1), lambda b, c: (b, c, 0)),
            ],
            out_specs=pl.BlockSpec((1, c_tile, N), lambda b, c: (b, c, 0)),
        ),
        compiler_params=pltpu.CompilerParams(
            dimension_semantics=("parallel", "parallel"),
            vmem_limit_bytes=_vmem_limit_bytes(block_in, block_f32, cap),
        ),
        cost_estimate=cost,
    )(x_bcn, smean_bc1, sstd_bc1)


def _adain_3d(x_blc, smean_b1c, sstd_b1c, eps, c_tile=None):
    """x_blc: (B, L, C); smean/sstd: (B, 1, C). Stats over L per (b, c)."""
    B, L, C = x_blc.shape
    itemsize = jnp.dtype(x_blc.dtype).itemsize
    target, cap, min_steps = _tpu_budgets()
    if c_tile is None:
        c_tile = _pick_tile(C, L, itemsize, 128, target)   # lane multiple
        c_tile = _shrink_for_steps(C, c_tile, 128, B, min_steps)
    c_tile = min(int(c_tile), C)

    block_in = L * c_tile * itemsize
    block_f32 = L * c_tile * 4
    s_item = jnp.dtype(smean_b1c.dtype).itemsize
    cost = pl.CostEstimate(
        flops=int(6 * B * C * L),
        transcendentals=int(2 * B * C),
        bytes_accessed=int(2 * B * C * L * itemsize + 4 * B * C * s_item),
    )

    kernel = functools.partial(_adain_lc_kernel, eps=float(eps), inv_nm1=_inv_nm1(L))
    return pl.pallas_call(
        kernel,
        out_shape=jax.ShapeDtypeStruct((B, L, C), x_blc.dtype),
        grid_spec=pltpu.PrefetchScalarGridSpec(
            num_scalar_prefetch=0,
            grid=(B, pl.cdiv(C, c_tile)),
            in_specs=[
                pl.BlockSpec((1, L, c_tile), lambda b, c: (b, 0, c)),
                pl.BlockSpec((1, 1, c_tile), lambda b, c: (b, 0, c)),
                pl.BlockSpec((1, 1, c_tile), lambda b, c: (b, 0, c)),
            ],
            out_specs=pl.BlockSpec((1, L, c_tile), lambda b, c: (b, 0, c)),
        ),
        compiler_params=pltpu.CompilerParams(
            dimension_semantics=("parallel", "parallel"),
            vmem_limit_bytes=_vmem_limit_bytes(block_in, block_f32, cap),
        ),
        cost_estimate=cost,
    )(x_blc, smean_b1c, sstd_b1c)


def adain_forward(content_features, style_mean, style_std, *, eps=1e-05, c_tile=None):
    """JAX/Pallas equivalent of AdaINLayer.forward.

    content_features: (B, C, H, W) with style_mean/std (B, C)
                   or (B, L, C)    with style_mean/std (B, 1, C)
    """
    if content_features.ndim == 4:
        B, C, H, W = content_features.shape
        N = H * W
        x = content_features.reshape(B, C, N)              # contiguous, free
        # Lane protection: small / 128-unaligned spatial maps would force
        # masked partial stores with N on the lane axis.  Route them through
        # the lane-dense-C (sublane-reduction) kernel instead.
        if (N % 128 != 0) and (C >= 128) and (C % 128 == 0):
            xt = jnp.swapaxes(x, 1, 2)                      # (B, N, C)
            sm = style_mean.reshape(B, 1, C)
            ss = style_std.reshape(B, 1, C)
            out = _adain_3d(xt, sm, ss, eps, c_tile)
            return jnp.swapaxes(out, 1, 2).reshape(B, C, H, W)
        sm = style_mean.reshape(B, C, 1)
        ss = style_std.reshape(B, C, 1)
        out = _adain_4d(x, sm, ss, eps, c_tile)
        return out.reshape(B, C, H, W)
    elif content_features.ndim == 3:
        B, L, C = content_features.shape
        sm = style_mean.reshape(B, 1, C)
        ss = style_std.reshape(B, 1, C)
        return _adain_3d(content_features, sm, ss, eps, c_tile)
    else:
        raise ValueError("content_features must be 3D or 4D")


# --------------------------------------------------------------------------
# Pure-JAX reference mirroring the PyTorch module
# --------------------------------------------------------------------------
def _adain_ref(content_features, style_mean, style_std, eps=1e-05):
    if content_features.ndim == 4:
        B, C, H, W = content_features.shape
        v = content_features.reshape(B, C, -1).astype(jnp.float32)
        mu = v.mean(axis=2, keepdims=True)
        std = jnp.sqrt(((v - mu) ** 2).sum(axis=2, keepdims=True) / (H * W - 1)) + eps
        norm = (v - mu) / std
        sty = norm * style_std.reshape(B, C, 1) + style_mean.reshape(B, C, 1)
        return sty.reshape(B, C, H, W)
    else:
        v = content_features.astype(jnp.float32)
        mu = v.mean(axis=1, keepdims=True)
        L = v.shape[1]
        std = jnp.sqrt(((v - mu) ** 2).sum(axis=1, keepdims=True) / (L - 1)) + eps
        norm = (v - mu) / std
        return norm * style_std + style_mean


if __name__ == "__main__":
    key = jax.random.PRNGKey(0)
    k1, k2, k3, k4, k5, k6, k7, k8, k9 = jax.random.split(key, 9)

    # ---- 4D path: (B, C, H, W) with style stats (B, C) ----
    B, C, H, W = 2, 4, 16, 16
    content_4d = jax.random.normal(k1, (B, C, H, W), dtype=jnp.float32)
    style_mean_4d = jax.random.normal(k2, (B, C), dtype=jnp.float32)
    style_std_4d = jax.random.uniform(k3, (B, C), dtype=jnp.float32) + 0.5

    out_4d = jax.block_until_ready(adain_forward(content_4d, style_mean_4d, style_std_4d))
    ref_4d = _adain_ref(content_4d, style_mean_4d, style_std_4d)
    assert out_4d.shape == (B, C, H, W)
    assert jnp.allclose(out_4d, ref_4d, atol=1e-4, rtol=1e-4)

    # ---- 3D path: (B, L, C) with style stats (B, 1, C), no transposes ----
    L, C3 = 8, 32
    content_3d = jax.random.normal(k4, (B, L, C3), dtype=jnp.float32)
    style_mean_3d = jax.random.normal(k5, (B, 1, C3), dtype=jnp.float32)
    style_std_3d = jax.random.uniform(k6, (B, 1, C3), dtype=jnp.float32) + 0.5

    out_3d = jax.block_until_ready(adain_forward(content_3d, style_mean_3d, style_std_3d))
    ref_3d = _adain_ref(content_3d, style_mean_3d, style_std_3d)
    assert out_3d.shape == (B, L, C3)
    assert jnp.allclose(out_3d, ref_3d, atol=1e-4, rtol=1e-4)

    # ---- 4D path with forced channel tiling (exercises the (B, C-tile) grid) ----
    Ct, Ht, Wt = 16, 8, 8
    content_t = jax.random.normal(k7, (B, Ct, Ht, Wt), dtype=jnp.float32)
    style_mean_t = jax.random.normal(k8, (B, Ct), dtype=jnp.float32)
    style_std_t = jax.random.uniform(k9, (B, Ct), dtype=jnp.float32) + 0.5
    out_t = jax.block_until_ready(
        adain_forward(content_t, style_mean_t, style_std_t, c_tile=8))
    ref_t = _adain_ref(content_t, style_mean_t, style_std_t)
    assert jnp.allclose(out_t, ref_t, atol=1e-4, rtol=1e-4)

    # ---- 3D path with forced lane tiling along C ----
    Cl = 256
    content_l = jax.random.normal(k1, (B, L, Cl), dtype=jnp.float32)
    style_mean_l = jax.random.normal(k2, (B, 1, Cl), dtype=jnp.float32)
    style_std_l = jax.random.uniform(k3, (B, 1, Cl), dtype=jnp.float32) + 0.5
    out_l = jax.block_until_ready(
        adain_forward(content_l, style_mean_l, style_std_l, c_tile=128))
    ref_l = _adain_ref(content_l, style_mean_l, style_std_l)
    assert jnp.allclose(out_l, ref_l, atol=1e-4, rtol=1e-4)

    # ---- 4D path with lane-unaligned H*W (7x7) -> routed to lane-dense-C ----
    Cu, Hu, Wu = 128, 7, 7
    content_u = jax.random.normal(k4, (B, Cu, Hu, Wu), dtype=jnp.float32)
    style_mean_u = jax.random.normal(k5, (B, Cu), dtype=jnp.float32)
    style_std_u = jax.random.uniform(k6, (B, Cu), dtype=jnp.float32) + 0.5
    out_u = jax.block_until_ready(adain_forward(content_u, style_mean_u, style_std_u))
    ref_u = _adain_ref(content_u, style_mean_u, style_std_u)
    assert jnp.allclose(out_u, ref_u, atol=1e-4, rtol=1e-4)

    print("KERNEL_OK")
</pallas_src>

<mosaic_0001>
module attributes {stable_mosaic.version = 11 : i64} {
  func.func @_adain_cn_kernel(%arg0: i32, %arg1: i32, %arg2: memref<1x4x256xf32, #tpu.memory_space<vmem>>, %arg3: memref<1x4x1xf32, #tpu.memory_space<vmem>>, %arg4: memref<1x4x1xf32, #tpu.memory_space<vmem>>, %arg5: memref<1x4x256xf32, #tpu.memory_space<vmem>>) attributes {dimension_semantics = [#tpu.dimension_semantics<parallel>, #tpu.dimension_semantics<parallel>], iteration_bounds = array<i64: 2, 1>, scalar_prefetch = 0 : i64, scratch_operands = 0 : i64, tpu.core_type = #tpu.core_type<tc>, window_params = [{transform_indices = @transform_0, window_bounds = array<i64: 1, 4, 256>}, {transform_indices = @transform_1, window_bounds = array<i64: 1, 4, 1>}, {transform_indices = @transform_2, window_bounds = array<i64: 1, 4, 1>}, {transform_indices = @transform_3, window_bounds = array<i64: 1, 4, 256>}]} {
    %c0 = arith.constant 0 : index
    %c0_0 = arith.constant 0 : index
    %c0_1 = arith.constant 0 : index
    %0 = vector.load %arg2[%c0, %c0_0, %c0_1] : memref<1x4x256xf32, #tpu.memory_space<vmem>>, vector<1x4x256xf32>
    %cst = arith.constant dense<0.000000e+00> : vector<1x4xf32>
    %1 = vector.multi_reduction <add>, %0, %cst [2] : vector<1x4x256xf32> to vector<1x4xf32>
    %2 = vector.shape_cast %1 : vector<1x4xf32> to vector<1x4x1xf32>
    %cst_2 = arith.constant 2.560000e+02 : f32
    %3 = vector.broadcast %cst_2 : f32 to vector<1x4x1xf32>
    %4 = arith.divf %2, %3 : vector<1x4x1xf32>
    %5 = vector.broadcast %4 : vector<1x4x1xf32> to vector<1x4x256xf32>
    %6 = arith.subf %0, %5 : vector<1x4x256xf32>
    %7 = arith.mulf %6, %6 : vector<1x4x256xf32>
    %cst_3 = arith.constant dense<0.000000e+00> : vector<1x4xf32>
    %8 = vector.multi_reduction <add>, %7, %cst_3 [2] : vector<1x4x256xf32> to vector<1x4xf32>
    %9 = vector.shape_cast %8 : vector<1x4xf32> to vector<1x4x1xf32>
    %cst_4 = arith.constant 0.00392156886 : f32
    %10 = vector.broadcast %cst_4 : f32 to vector<1x4x1xf32>
    %11 = arith.mulf %9, %10 : vector<1x4x1xf32>
    %12 = math.sqrt %11 : vector<1x4x1xf32>
    %cst_5 = arith.constant 9.99999974E-6 : f32
    %13 = vector.broadcast %cst_5 : f32 to vector<1x4x1xf32>
    %14 = arith.addf %12, %13 : vector<1x4x1xf32>
    %15 = tpu.reciprocal %14 : vector<1x4x1xf32> -> vector<1x4x1xf32>
    %c0_6 = arith.constant 0 : index
    %c0_7 = arith.constant 0 : index
    %c0_8 = arith.constant 0 : index
    %16 = vector.load %arg4[%c0_6, %c0_7, %c0_8] : memref<1x4x1xf32, #tpu.memory_space<vmem>>, vector<1x4x1xf32>
    %17 = arith.mulf %16, %15 : vector<1x4x1xf32>
    %c0_9 = arith.constant 0 : index
    %c0_10 = arith.constant 0 : index
    %c0_11 = arith.constant 0 : index
    %18 = vector.load %arg3[%c0_9, %c0_10, %c0_11] : memref<1x4x1xf32, #tpu.memory_space<vmem>>, vector<1x4x1xf32>
    %19 = arith.mulf %4, %17 : vector<1x4x1xf32>
    %20 = arith.subf %18, %19 : vector<1x4x1xf32>
    %21 = vector.broadcast %17 : vector<1x4x1xf32> to vector<1x4x256xf32>
    %22 = arith.mulf %0, %21 : vector<1x4x256xf32>
    %23 = vector.broadcast %20 : vector<1x4x1xf32> to vector<1x4x256xf32>
    %24 = arith.addf %22, %23 : vector<1x4x256xf32>
    %c0_12 = arith.constant 0 : index
    %c0_13 = arith.constant 0 : index
    %c0_14 = arith.constant 0 : index
    %25 = vector.load %arg5[%c0_12, %c0_13, %c0_14] : memref<1x4x256xf32, #tpu.memory_space<vmem>>, vector<1x4x256xf32>
    tpu.vector_store %arg5[%c0_12, %c0_13, %c0_14], %24 {strides = array<i32>} : memref<1x4x256xf32, #tpu.memory_space<vmem>>, vector<1x4x256xf32>,
    return
  }
  func.func @transform_0(%arg0: i32, %arg1: i32) -> (i32, i32, i32) {
    %c0_i32 = arith.constant 0 : i32
    %c0_i32_0 = arith.constant 0 : i32
    return %arg0, %arg1, %c0_i32 : i32, i32, i32
  }
  func.func @transform_1(%arg0: i32, %arg1: i32) -> (i32, i32, i32) {
    %c0_i32 = arith.constant 0 : i32
    %c0_i32_0 = arith.constant 0 : i32
    return %arg0, %arg1, %c0_i32 : i32, i32, i32
  }
  func.func @transform_2(%arg0: i32, %arg1: i32) -> (i32, i32, i32) {
    %c0_i32 = arith.constant 0 : i32
    %c0_i32_0 = arith.constant 0 : i32
    return %arg0, %arg1, %c0_i32 : i32, i32, i32
  }
  func.func @transform_3(%arg0: i32, %arg1: i32) -> (i32, i32, i32) {
    %c0_i32 = arith.constant 0 : i32
    %c0_i32_0 = arith.constant 0 : i32
    return %arg0, %arg1, %c0_i32 : i32, i32, i32
  }
}

</mosaic_0001>

<llo_original>
// kernel: tpu_custom_call.1
$region0: #{tpu_custom_call.1}
  #allocation0 [shape = 'u32[]', space=smem, size = 0x4, offset = 0x4, fixed_abs, tag = 'smem constant byte address 0x4 - core index']
  #allocation1 [shape = 'u32[144,128]{1,0:T(1,128)}', space=vmem, size = 0x12000, scoped, tag = 'internal scratch']
  %s0 = inlined_call_operand.vmem [shape: f32[2,4,256], index: 0, kind: input, shape index: {}]
  %s1 = inlined_call_operand.vmem [shape: f32[2,4,1], index: 1, kind: input, shape index: {}]
  %s2 = inlined_call_operand.vmem [shape: f32[2,4,1], index: 2, kind: input, shape index: {}]
  %s3 = inlined_call_operand.hbm [shape: f32[2,4,256], index: 3, kind: output, shape index: {}]
  %s4 = sld [smem:[#allocation0]]
  $region45: #{tpu_custom_call.1} parent=0
    _
  %s6 = ssub.s32 1, %s4
  %s7 = scalar_select 0, %s6, %s4
  $region1: #{tpu_custom_call.1} parent=0
    #allocation2 [shape = 'u8[8192]{0}', space=vmem, size = 0x2000, scoped, tag = 'output window, operand 0']
    #allocation3 [shape = 's32[2]{0}', space=sflag, size = 0x8, scoped, tag = 'scoped memory for tpu_custom_call.1']
    %8 = vsyncpa [#allocation3], 0
    %s9 = scalar_lea.sflag [#allocation3], 1
    %10 = vsyncpa %s9, 0
    loop: start=0, step=1, limit=4
    $region2: #{tpu_custom_call.1} parent=1 // loop_pre_header
      _
    $region3: #{tpu_custom_call.1} parent=1 // loop_header
      %s12 = sphi 0, %s16
      %p13 = scmp.ge.s32.totalorder %s12, 4
      %s19 = sphi 0, %s31
      %s20 = sphi 0, %s27
      %s21 = sphi 0, %s19
      %s22 = sphi 0, %s20
      %s23 = sphi 0, %s21
      %s24 = sphi 0, %s22
      %s36 = sphi 0, %s38
      %s39 = sphi 0, %s36
      %s40 = sphi 0, %s39
      %s56 = sphi 0, %s40
      %s64 = sphi 0, %s66
      %s67 = sphi 0, %s64
      %s68 = sphi 0, %s67
      %s84 = sphi 0, %s68
      %s92 = sphi 0, %s94
      %s95 = sphi 0, %s92
      %s96 = sphi 0, %s95
      %s112 = sphi 0, %s96
      %s120 = sphi 0, %s122
      %s123 = sphi 0, %s120
      %s124 = sphi 0, %s123
      %s140 = sphi 0, %s124
    $region4: #{tpu_custom_call.1} parent=1 // loop_header_branch
      %15 = sbr.rel (%p13) target = $region8
    $region5: #{tpu_custom_call.1} parent=1 // loop_body
      %s17 = ssub.s32 %s12, 1
      %s18 = ssub.s32 %s12, 2
      %s25 = sadd.s32 1, %s20
      %p26 = scmp.ge.s32.totalorder %s25, 1
      %s27 = scalar_select %p26, 0, %s25
      %s28 = sadd.s32 1, %s19
      %s29 = scalar_select %p26, %s28, %s19
      %p30 = scmp.ge.s32.totalorder %s29, 2
      %s31 = scalar_select %p30, 0, %s29
      %s32 = ssub.s32 %s19, %s31
      %s33 = ssub.s32 %s20, %s27
      %s34 = sor.u32 %s32, %s33
      %p35 = scmp.eq.s32.totalorder %s34, 0
      %s37 = sadd.s32 %s36, 1
      %s38 = scalar_select %p35, %s36, %s37
      %p41 = pneg %p35
      %p42 = scmp.eq.s32.totalorder %s12, 1
      %p43 = por %p41, %p42
      %p44 = scmp.ne.s32.totalorder %s36, %s39
      %p45 = scmp.eq.s32.totalorder %s12, 0
      %p46 = por %p44, %p45
      %p47 = scmp.ne.s32.totalorder %s36, %s39
      %p48 = scmp.eq.s32.totalorder %s17, 1
      %p49 = por %p47, %p48
      %p50 = scmp.ne.s32.totalorder %s39, %s40
      %p51 = scmp.eq.s32.totalorder %s17, 0
      %p52 = por %p50, %p51
      %p53 = scmp.ne.s32.totalorder %s39, %s40
      %p54 = scmp.eq.s32.totalorder %s18, 1
      %p55 = por %p53, %p54
      %p57 = scmp.ne.s32.totalorder %s40, %s56
      %p58 = scmp.eq.s32.totalorder %s18, 0
      %p59 = por %p57, %p58
      %s60 = ssub.s32 %s19, %s31
      %s61 = ssub.s32 %s20, %s27
      %s62 = sor.u32 %s60, %s61
      %p63 = scmp.eq.s32.totalorder %s62, 0
      %s65 = sadd.s32 %s64, 1
      %s66 = scalar_select %p63, %s64, %s65
      %p69 = pneg %p63
      %p70 = scmp.eq.s32.totalorder %s12, 1
      %p71 = por %p69, %p70
      %p72 = scmp.ne.s32.totalorder %s64, %s67
      %p73 = scmp.eq.s32.totalorder %s12, 0
      %p74 = por %p72, %p73
      %p75 = scmp.ne.s32.totalorder %s64, %s67
      %p76 = scmp.eq.s32.totalorder %s17, 1
      %p77 = por %p75, %p76
      %p78 = scmp.ne.s32.totalorder %s67, %s68
      %p79 = scmp.eq.s32.totalorder %s17, 0
      %p80 = por %p78, %p79
      %p81 = scmp.ne.s32.totalorder %s67, %s68
      %p82 = scmp.eq.s32.totalorder %s18, 1
      %p83 = por %p81, %p82
      %p85 = scmp.ne.s32.totalorder %s68, %s84
      %p86 = scmp.eq.s32.totalorder %s18, 0
      %p87 = por %p85, %p86
      %s88 = ssub.s32 %s19, %s31
      %s89 = ssub.s32 %s20, %s27
      %s90 = sor.u32 %s88, %s89
      %p91 = scmp.eq.s32.totalorder %s90, 0
      %s93 = sadd.s32 %s92, 1
      %s94 = scalar_select %p91, %s92, %s93
      %p97 = pneg %p91
      %p98 = scmp.eq.s32.totalorder %s12, 1
      %p99 = por %p97, %p98
      %p100 = scmp.ne.s32.totalorder %s92, %s95
      %p101 = scmp.eq.s32.totalorder %s12, 0
      %p102 = por %p100, %p101
      %p103 = scmp.ne.s32.totalorder %s92, %s95
      %p104 = scmp.eq.s32.totalorder %s17, 1
      %p105 = por %p103, %p104
      %p106 = scmp.ne.s32.totalorder %s95, %s96
      %p107 = scmp.eq.s32.totalorder %s17, 0
      %p108 = por %p106, %p107
      %p109 = scmp.ne.s32.totalorder %s95, %s96
      %p110 = scmp.eq.s32.totalorder %s18, 1
      %p111 = por %p109, %p110
      %p113 = scmp.ne.s32.totalorder %s96, %s112
      %p114 = scmp.eq.s32.totalorder %s18, 0
      %p115 = por %p113, %p114
      %s116 = ssub.s32 %s19, %s31
      %s117 = ssub.s32 %s20, %s27
      %s118 = sor.u32 %s116, %s117
      %p119 = scmp.eq.s32.totalorder %s118, 0
      %s121 = sadd.s32 %s120, 1
      %s122 = scalar_select %p119, %s120, %s121
      %p125 = pneg %p119
      %p126 = scmp.eq.s32.totalorder %s12, 1
      %p127 = por %p125, %p126
      %p128 = scmp.ne.s32.totalorder %s120, %s123
      %p129 = scmp.eq.s32.totalorder %s12, 0
      %p130 = por %p128, %p129
      %p131 = scmp.ne.s32.totalorder %s120, %s123
      %p132 = scmp.eq.s32.totalorder %s17, 1
      %p133 = por %p131, %p132
      %p134 = scmp.ne.s32.totalorder %s123, %s124
      %p135 = scmp.eq.s32.totalorder %s17, 0
      %p136 = por %p134, %p135
      %p137 = scmp.ne.s32.totalorder %s123, %s124
      %p138 = scmp.eq.s32.totalorder %s18, 1
      %p139 = por %p137, %p138
      %p141 = scmp.ne.s32.totalorder %s124, %s140
      %p142 = scmp.eq.s32.totalorder %s18, 0
      %p143 = por %p141, %p142
      %p144 = scmp.le.s32.totalorder 1, %s12
      %p145 = scmp.lt.s32.totalorder %s12, 3
      %p146 = pnand %p144, %p145
      %p147 = pneg %p146
      // Predicated region
      $region9: #{tpu_custom_call.1} parent=5 // pred_check
        _
      $region10: #{tpu_custom_call.1} parent=5 // pred_check_branch
        %149 = sbr.rel (%p146) target = $region12
      $region11: #{tpu_custom_call.1} parent=5 // pred_region
        %s150 = ssub.s32 %s12, 1
      $region12: #{tpu_custom_call.1} parent=5 // pred_fallthru
        _
      %p151 = scmp.lt.s32.totalorder %s12, 2
      // Predicated region
      $region13: #{tpu_custom_call.1} parent=5 // pred_check
        %p152 = pneg %p151
      $region14: #{tpu_custom_call.1} parent=5 // pred_check_branch
        %154 = sbr.rel (%p152) target = $region16
      $region15: #{tpu_custom_call.1} parent=5 // pred_region
        // Predicated region
        $region17: #{tpu_custom_call.1} parent=15 // pred_check
          %p155 = pneg %p46
        $region18: #{tpu_custom_call.1} parent=15 // pred_check_branch
          %157 = sbr.rel (%p155) target = $region20
        $region19: #{tpu_custom_call.1} parent=15 // pred_region
          %p158 = scmp.lt.s32.totalorder %s19, 1
          %s159 = scalar_select %p158, %s19, 1
          %p160 = scmp.lt.s32.totalorder %s20, 0
          %s161 = scalar_select %p160, %s20, 0
          %s162 = smul.addr %s161, 2
          %s163 = smul.addr %s159, 2
          %s164 = sadd.s32 %s162, %s163
          %s165 = smul.addr %s164, 4
          %s166 = scalar_lea.vmem %s0, %s165
        $region20: #{tpu_custom_call.1} parent=15 // pred_fallthru
          _
        // Predicated region
        $region21: #{tpu_custom_call.1} parent=15 // pred_check
          %p167 = pneg %p74
        $region22: #{tpu_custom_call.1} parent=15 // pred_check_branch
          %169 = sbr.rel (%p167) target = $region24
        $region23: #{tpu_custom_call.1} parent=15 // pred_region
          %p170 = scmp.lt.s32.totalorder %s19, 1
          %s171 = scalar_select %p170, %s19, 1
          %p172 = scmp.lt.s32.totalorder %s20, 0
          %s173 = scalar_select %p172, %s20, 0
          %s174 = sadd.s32 %s173, %s171
          %s175 = smul.addr %s174, 4
          %s176 = scalar_lea.vmem %s1, %s175
        $region24: #{tpu_custom_call.1} parent=15 // pred_fallthru
          _
        // Predicated region
        $region25: #{tpu_custom_call.1} parent=15 // pred_check
          %p177 = pneg %p102
        $region26: #{tpu_custom_call.1} parent=15 // pred_check_branch
          %179 = sbr.rel (%p177) target = $region28
        $region27: #{tpu_custom_call.1} parent=15 // pred_region
          %p180 = scmp.lt.s32.totalorder %s19, 1
          %s181 = scalar_select %p180, %s19, 1
          %p182 = scmp.lt.s32.totalorder %s20, 0
          %s183 = scalar_select %p182, %s20, 0
          %s184 = sadd.s32 %s183, %s181
          %s185 = smul.addr %s184, 4
          %s186 = scalar_lea.vmem %s2, %s185
        $region28: #{tpu_custom_call.1} parent=15 // pred_fallthru
          _
      $region16: #{tpu_custom_call.1} parent=5 // pred_fallthru
        _
      %p187 = scmp.le.s32.totalorder 1, %s12
      %p188 = scmp.lt.s32.totalorder %s12, 3
      %p189 = pnand %p187, %p188
      %p190 = pneg %p189
      // Predicated region
      $region29: #{tpu_custom_call.1} parent=5 // pred_check
        _
      $region30: #{tpu_custom_call.1} parent=5 // pred_check_branch
        %192 = sbr.rel (%p189) target = $region32
      $region31: #{tpu_custom_call.1} parent=5 // pred_region
        %s193 = ssub.s32 %s12, 1
        %p194 = scmp.lt.s32.totalorder %s21, 1
        %s195 = scalar_select %p194, %s21, 1
        %p196 = scmp.lt.s32.totalorder %s22, 0
        %s197 = scalar_select %p196, %s22, 0
        %s198 = smul.addr %s197, 2
        %s199 = smul.addr %s195, 2
        %s200 = sadd.s32 %s198, %s199
        %s201 = smul.addr %s200, 4
        %s202 = scalar_lea.vmem %s0, %s201
        %p203 = pneg %p52
        %p204 = pneg %p49
        %p205 = scmp.lt.s32.totalorder %s21, 1
        %s206 = scalar_select %p205, %s21, 1
        %p207 = scmp.lt.s32.totalorder %s22, 0
        %s208 = scalar_select %p207, %s22, 0
        %s209 = sadd.s32 %s208, %s206
        %s210 = smul.addr %s209, 4
        %s211 = scalar_lea.vmem %s1, %s210
        %p212 = pneg %p80
        %p213 = pneg %p77
        %p214 = scmp.lt.s32.totalorder %s21, 1
        %s215 = scalar_select %p214, %s21, 1
        %p216 = scmp.lt.s32.totalorder %s22, 0
        %s217 = scalar_select %p216, %s22, 0
        %s218 = sadd.s32 %s217, %s215
        %s219 = smul.addr %s218, 4
        %s220 = scalar_lea.vmem %s2, %s219
        %p221 = pneg %p108
        %p222 = pneg %p105
        %p223 = pneg %p136
        %p224 = pneg %p133
        %s225 = sand.u32 %s123, 1
        %s226 = scalar_lea.sflag [#allocation3], %s225
        %s227 = sand.u32 %s123, 1
        %s228 = smul.addr %s227, 8
        %s229 = scalar_lea.vmem [#allocation2], %s228
        %p230 = scmp.lt.s32.totalorder %s21, 1
        %s231 = scalar_select %p230, %s21, 1
        %p232 = scmp.lt.s32.totalorder %s22, 0
        %s233 = scalar_select %p232, %s22, 0
        %s234 = smul.addr %s233, 2
        %s235 = smul.addr %s231, 2
        %s236 = sadd.s32 %s234, %s235
        %s237 = smul.addr %s236, 4
        %s238 = scalar_lea.vmem %s0, %s237
        %p239 = scmp.lt.s32.totalorder %s21, 1
        %s240 = scalar_select %p239, %s21, 1
        %p241 = scmp.lt.s32.totalorder %s22, 0
        %s242 = scalar_select %p241, %s22, 0
        %s243 = sadd.s32 %s242, %s240
        %s244 = smul.addr %s243, 4
        %s245 = scalar_lea.vmem %s1, %s244
        %p246 = scmp.lt.s32.totalorder %s21, 1
        %s247 = scalar_select %p246, %s21, 1
        %p248 = scmp.lt.s32.totalorder %s22, 0
        %s249 = scalar_select %p248, %s22, 0
        %s250 = sadd.s32 %s249, %s247
        %s251 = smul.addr %s250, 4
        %s252 = scalar_lea.vmem %s2, %s251
        %v253 = vld [vmem:[%s238] sm:$0xff]
        %v255 = vcombine.high %v253, %v253
        %vm257 = vcmask 1043456
        %v258 = vsel %vm257, %v253, 0.0
        %v259 = vsel %vm257, %v255, 0.0
        %v260 = vadd.f32 %v258, %v259
        %261 = vadd.xlane.f32.xlu0 %v260
        %v262 = vpop.xlane.xlu0 %261
        %v263 = vrcp.pop 256.0
        %v264 = vmul.f32 %v262, %v263
        %v267 = vunpack.c.l.s4 839922192
        %v268 = vunpack.c.0.s8 %v267
        %v269 = vlaneseq
        %v270 = vshrl.u32 %v269, 7
        %v271 = vsub.s32 %v268, %v270
        %v272 = vrot.slane %v264, %v271
        %v274 = vsub.f32 %v253, %v272
        %v275 = vmul.f32 %v274, %v274
        %v277 = vcombine.high %v275, %v275
        %v279 = vsel %vm257, %v275, 0.0
        %v280 = vsel %vm257, %v277, 0.0
        %v281 = vadd.f32 %v279, %v280
        %282 = vadd.xlane.f32.xlu0 %v281
        %v283 = vpop.xlane.xlu0 %282
        %v284 = vmul.f32 %v283, 0.003921569
        %v285 = vrsqrt.pop %v284
        %v286 = vmul.f32 %v284, %v285
        %vm287 = vcmp.eq.f32.partialorder %v284, inf
        %v288 = vsel %vm287, %v284, %v286
        %vm289 = vcmp.eq.f32.partialorder %v284, 0.0
        %v290 = vand.u32 %v284, 2147483648
        %v291 = vsel %vm289, %v290, %v288
        %v292 = vadd.f32 %v291, 1e-05
        %v293 = vrcp.pop %v292
        %v294 = vld [vmem:[%s252] sm:$0xf]
        %v295 = vmul.f32 %v294, %v293
        %v296 = vld [vmem:[%s245] sm:$0xf]
        %v297 = vmul.f32 %v264, %v295
        %v298 = vsub.f32 %v296, %v297
        %300 = vset.pattern.permute.xlu0 0
        %301 = vperm.xlu0 %300, %v295
        %v302 = vpop.permute.xlu0 %301
        %v304 = vunpack.c.l.s4 839922192
        %v305 = vunpack.c.0.s8 %v304
        %v306 = vlaneseq
        %v307 = vshrl.u32 %v306, 7
        %v308 = vsub.s32 %v305, %v307
        %v309 = vrot.slane %v302, %v308
        %v311 = vmul.f32 %v253, %v309
        %313 = vset.pattern.permute.xlu0 0
        %314 = vperm.xlu0 %313, %v298
        %v315 = vpop.permute.xlu0 %314
        %v317 = vunpack.c.l.s4 839922192
        %v318 = vunpack.c.0.s8 %v317
        %v319 = vlaneseq
        %v320 = vshrl.u32 %v319, 7
        %v321 = vsub.s32 %v318, %v320
        %v322 = vrot.slane %v315, %v321
        %v324 = vadd.f32 %v311, %v322
        %325 = vst [vmem:[%s229] sm:$0xff] %v324
        %s326 = sand.u32 %s123, 1
        %s327 = scalar_lea.sflag [#allocation3], %s326
        %s328 = sand.u32 %s123, 1
        %s329 = smul.addr %s328, 8
        %s330 = scalar_lea.vmem [#allocation2], %s329
        // Predicated region
        $region33: #{tpu_custom_call.1} parent=31 // pred_check
          %p331 = pneg %p133
        $region34: #{tpu_custom_call.1} parent=31 // pred_check_branch
          %333 = sbr.rel (%p331) target = $region36
        $region35: #{tpu_custom_call.1} parent=31 // pred_region
          %s335 = ssub.s32 128, 128
          %336 = vsyncadd %s327, %s335
          %s337 = smul.addr %s22, 2
          %s338 = smul.addr %s21, 2
          %s339 = sadd.s32 %s337, %s338
          %s340 = smul.addr %s339, 64
          %s341 = scalar_lea.hbm %s3, %s340
          %s343 = sshll.u32 %s330, 4
          %s344 = int_to_ptr.vmem [resolvable:$true] %s343
          %346 = dma.vmem_to_hbm [thread:$0]  %s344, 128, %s341, %s327
        $region36: #{tpu_custom_call.1} parent=31 // pred_fallthru
          _
      $region32: #{tpu_custom_call.1} parent=5 // pred_fallthru
        _
      %p347 = scmp.le.s32.totalorder 2, %s12
      // Predicated region
      $region37: #{tpu_custom_call.1} parent=5 // pred_check
        %p348 = pneg %p347
      $region38: #{tpu_custom_call.1} parent=5 // pred_check_branch
        %350 = sbr.rel (%p348) target = $region40
      $region39: #{tpu_custom_call.1} parent=5 // pred_region
        %s351 = ssub.s32 %s12, 2
        // Predicated region
        $region41: #{tpu_custom_call.1} parent=39 // pred_check
          %p352 = pneg %p139
        $region42: #{tpu_custom_call.1} parent=39 // pred_check_branch
          %354 = sbr.rel (%p352) target = $region44
        $region43: #{tpu_custom_call.1} parent=39 // pred_region
          %s355 = sand.u32 %s124, 1
          %s356 = scalar_lea.sflag [#allocation3], %s355
          %s357 = sand.u32 %s124, 1
          %s358 = smul.addr %s357, 8
          %s359 = scalar_lea.vmem [#allocation2], %s358
          %360 = dma.done %s356, 128
        $region44: #{tpu_custom_call.1} parent=39 // pred_fallthru
          _
      $region40: #{tpu_custom_call.1} parent=5 // pred_fallthru
        _
    $region6: #{tpu_custom_call.1} parent=1 // loop_footer
      %s16 = sadd.s32 1, %s12
    $region7: #{tpu_custom_call.1} parent=1 // loop_footer_branch
      %11 = sbr.rel target = $region3
    $region8: #{tpu_custom_call.1} parent=1 // loop_exit
      _
    %361 = vsyncpa [#allocation3], 1
    %s362 = scalar_lea.sflag [#allocation3], 1
    %363 = vsyncpa %s362, 1

</llo_original>
